<compile_context>
chip_gen: v5e
topology: v5e:2x2
jax: 0.10.0
libtpu: 0.0.40
codegen_flags: <defaults>
</compile_context>

<pallas_src>
import jax
import jax.numpy as jnp
import numpy as np
from jax.experimental import pallas as pl
from jax.experimental.pallas import tpu as pltpu


# MXU input / activation dtype: bf16 is native on v5e/v6e/v7x MXUs and halves
# activation HBM traffic; accumulation, bias and ReLU remain float32.
ACT_DTYPE = jnp.bfloat16


def _round_up(x, m):
    return ((x + m - 1) // m) * m


def _choose_tm(m):
    """Row tile: large to amortize per-step overhead, but keep >= 8 'parallel'
    grid steps when possible so both v7x TensorCores get a pipelined stream of
    work (not a single un-overlapped step each). Multiple of 16 for bf16
    sublane packing. tm=4096 keeps the double-buffered bf16 footprint at
    ~4.5 MiB -- comfortable even on v7x's 64 MiB VMEM."""
    tm = 4096
    while tm > 256 and pl.cdiv(m, tm) < 8:
        tm //= 2
    return min(tm, _round_up(m, 16))


# ----------------------------------------------------------------------------
# Pallas kernel: fused (3x3-base-as-matmul + ReLU) -> (heads + folded decoder)
# ----------------------------------------------------------------------------
def _shell_fused_kernel(cols_ref, w1_ref, b1_ref, w2_ref, b2_ref, o_ref):
    # (tm, 36) bf16 @ (36, 32) bf16 -> f32 accumulate; bias + ReLU in f32
    feat = jnp.dot(cols_ref[...], w1_ref[...], preferred_element_type=jnp.float32)
    feat = jnp.maximum(feat + b1_ref[...], 0.0)
    # (tm, 32) bf16 @ (32, 128) bf16 -> f32 (4 heads + folded decoder, padded lanes)
    out = jnp.dot(feat.astype(w2_ref.dtype), w2_ref[...],
                  preferred_element_type=jnp.float32)
    o_ref[...] = (out + b2_ref[...]).astype(o_ref.dtype)   # lane-dense bf16 store


def fused_base_heads_decoder(cols, w1, b1, w2, b2):
    """cols:(M,K1) -> relu(cols@w1+b1) @ w2 + b2 -> (M,N) bf16. N must be 128-aligned."""
    m, k1 = cols.shape
    k1b, c_mid = w1.shape
    c_mid2, n = w2.shape
    assert k1 == k1b and c_mid == c_mid2
    assert n % 128 == 0 and b1.shape == (1, c_mid) and b2.shape == (1, n)

    tm = _choose_tm(m)
    m_pad = _round_up(m, tm)
    if m_pad != m:                      # masked-tail handling via zero padding
        cols = jnp.pad(cols, ((0, m_pad - m), (0, 0)))

    cost = pl.CostEstimate(
        flops=2 * m_pad * (k1 * c_mid + c_mid * n),
        transcendentals=0,
        bytes_accessed=(m_pad * k1 * cols.dtype.itemsize          # cols read (bf16)
                        + m_pad * n * 2                           # output write (bf16)
                        + w1.size * 2 + w2.size * 2               # bf16 weights
                        + b1.size * 4 + b2.size * 4),             # f32 biases
    )

    out = pl.pallas_call(
        _shell_fused_kernel,
        out_shape=jax.ShapeDtypeStruct((m_pad, n), jnp.bfloat16),
        grid_spec=pltpu.PrefetchScalarGridSpec(
            num_scalar_prefetch=0,
            grid=(m_pad // tm,),
            in_specs=[
                pl.BlockSpec((tm, k1), lambda i: (i, 0)),
                pl.BlockSpec((k1, c_mid), lambda i: (0, 0)),   # VMEM-resident
                pl.BlockSpec((1, c_mid), lambda i: (0, 0)),
                pl.BlockSpec((c_mid, n), lambda i: (0, 0)),
                pl.BlockSpec((1, n), lambda i: (0, 0)),
            ],
            out_specs=pl.BlockSpec((tm, n), lambda i: (i, 0)),
        ),
        compiler_params=pltpu.CompilerParams(
            dimension_semantics=("parallel",),
            vmem_limit_bytes=32 * 1024 * 1024),
        cost_estimate=cost,
    )(cols, w1, b1, w2, b2)
    return out[:m]


# ----------------------------------------------------------------------------
# Plain-JAX glue
# ----------------------------------------------------------------------------
def im2col_3x3(x_nchw, dtype=ACT_DTYPE):
    """(B, C, H, W) -> (B*H*W, C*9) in `dtype`, patch order (c, ky, kx), 'same' pad.

    TODO(synk): at production resolutions (mainly v5e) replace this with an
    in-kernel halo'd 3x3 (9 shifted dots on an NHWC row tile) to avoid the
    ~9x expansion + HBM round-trip of the cols slab.
    """
    B, C, H, W = x_nchw.shape
    xp = jnp.pad(x_nchw.astype(dtype), ((0, 0), (0, 0), (1, 1), (1, 1)))
    cols = []
    for dy in range(3):
        for dx in range(3):
            cols.append(xp[:, :, dy:dy + H, dx:dx + W])
    patches = jnp.stack(cols, axis=2)                 # (B, C, 9, H, W)
    patches = patches.transpose(0, 3, 4, 1, 2)        # (B, H, W, C, 9)
    return patches.reshape(B * H * W, C * 9)


def _build_fused_weights(params, c_in, act_dtype=ACT_DTYPE):
    """Pack base conv weight + (heads | decoder-folded) fused weight (128 lanes)."""
    oc = params["base_w"].shape[0]
    w1 = params["base_w"].reshape(oc, c_in * 9).T              # (C*9, 32)
    b1 = params["base_b"].reshape(1, oc)

    w_heads = jnp.concatenate(
        [params["pif_conf_w"], params["pif_reg_w"],
         params["paf_conf_w"], params["paf_reg_w"]], axis=1)   # (32, 24)
    b_heads = jnp.concatenate(
        [params["pif_conf_b"], params["pif_reg_b"],
         params["paf_conf_b"], params["paf_reg_b"]])           # (24,)

    w_dec = w_heads @ params["dec_w"]                          # (32, 19)
    b_dec = b_heads @ params["dec_w"] + params["dec_b"]        # (19,)

    w2 = jnp.concatenate([w_heads, w_dec], axis=1)             # (32, 43)
    b2 = jnp.concatenate([b_heads, b_dec])                     # (43,)
    n_live = w2.shape[1]
    n_pad = _round_up(n_live, 128)                             # lane-dense output
    w2 = jnp.pad(w2, ((0, 0), (0, n_pad - n_live)))
    b2 = jnp.pad(b2, (0, n_pad - n_live)).reshape(1, n_pad)

    # bf16 MXU weights; biases stay f32 (added after the f32 accumulation).
    return w1.astype(act_dtype), b1, w2.astype(act_dtype), b2, n_live


# ----------------------------------------------------------------------------
# Shell forward (single Pallas dispatch)
# ----------------------------------------------------------------------------
def shell_forward(params, image_batch):
    # eval mode: training-only cross_talk branch skipped (cross_talk == 0.0)
    B, C, H, W = image_batch.shape
    cols = im2col_3x3(image_batch)                             # (B*H*W, C*9) bf16
    w1, b1, w2, b2, n_live = _build_fused_weights(params, C)

    out = fused_base_heads_decoder(cols, w1, b1, w2, b2)       # (B*H*W, 128) bf16

    # Consolidated layout pass: one (B,H,W,43)->(B,43,H,W) transpose (fused
    # with the f32 cast at the module's return boundary), then cheap channel
    # slices; only the 19-ch alignment needs an extra W/H swap.
    slab = out.reshape(B, H, W, -1)[..., :n_live]              # (B, H, W, 43) bf16
    chw = slab.transpose(0, 3, 1, 2).astype(jnp.float32)       # (B, 43, H, W)

    pif_conf = chw[:, 0:5]                                     # (B,5,H,W)
    pif_reg = chw[:, 5:15].reshape(B, 5, 2, H, W)              # (B,5,2,H,W)
    paf_conf = chw[:, 15:18]                                   # (B,3,H,W)
    paf_reg = chw[:, 18:24].reshape(B, 3, 2, H, W)             # (B,3,2,H,W)
    predicted_alignment = chw[:, 24:43].swapaxes(-1, -2)       # (B,19,W,H)

    head_outputs = [(pif_conf, pif_reg), (paf_conf, paf_reg)]
    return head_outputs + [predicted_alignment]


# ----------------------------------------------------------------------------
# Pure-JAX unfused f32 reference (mirrors the PyTorch control flow exactly)
# ----------------------------------------------------------------------------
def shell_forward_reference(params, image_batch):
    B, C, H, W = image_batch.shape
    cols = im2col_3x3(image_batch, dtype=jnp.float32)
    feat = jnp.maximum(
        cols @ params["base_w"].reshape(32, C * 9).T + params["base_b"], 0.0)
    feat = feat.reshape(B, H, W, 32)

    pif_conf = (feat @ params["pif_conf_w"] + params["pif_conf_b"]).transpose(0, 3, 1, 2)
    pif_reg = (feat @ params["pif_reg_w"] + params["pif_reg_b"]
               ).transpose(0, 3, 1, 2).reshape(B, 5, 2, H, W)
    paf_conf = (feat @ params["paf_conf_w"] + params["paf_conf_b"]).transpose(0, 3, 1, 2)
    paf_reg = (feat @ params["paf_reg_w"] + params["paf_reg_b"]
               ).transpose(0, 3, 1, 2).reshape(B, 3, 2, H, W)
    head_outputs = [(pif_conf, pif_reg), (paf_conf, paf_reg)]

    merged_results = []
    for outputs in head_outputs:
        for output in outputs:
            if output.ndim == 4:
                merged_results.append(output.transpose(0, 2, 3, 1).reshape(B, H, W, -1))
            elif output.ndim == 5:
                merged_results.append(output.transpose(0, 3, 4, 1, 2).reshape(B, H, W, -1))
    merged = jnp.concatenate(merged_results, axis=3).transpose(0, 3, 2, 1)  # (B,24,W,H)
    alignment = (jnp.einsum("bcwh,cd->bdwh", merged, params["dec_w"])
                 + params["dec_b"][None, :, None, None])
    return head_outputs + [alignment]


# ----------------------------------------------------------------------------
# Deterministic parameter init + run
# ----------------------------------------------------------------------------
def init_params():
    keys = jax.random.split(jax.random.PRNGKey(42), 12)

    def norm(k, shape, scale=0.1):
        return scale * jax.random.normal(k, shape, jnp.float32)

    return {
        "base_w": norm(keys[0], (32, 4, 3, 3)),
        "base_b": norm(keys[1], (32,)),
        "pif_conf_w": norm(keys[2], (32, 5)),
        "pif_conf_b": norm(keys[3], (5,)),
        "pif_reg_w": norm(keys[4], (32, 10)),
        "pif_reg_b": norm(keys[5], (10,)),
        "paf_conf_w": norm(keys[6], (32, 3)),
        "paf_conf_b": norm(keys[7], (3,)),
        "paf_reg_w": norm(keys[8], (32, 6)),
        "paf_reg_b": norm(keys[9], (6,)),
        # merged channels = 5 + 5*2 + 3 + 3*2 = 24
        "dec_w": norm(keys[10], (24, 19)),
        "dec_b": norm(keys[11], (19,)),
    }


if __name__ == "__main__":
    params = init_params()
    image = jax.random.normal(jax.random.PRNGKey(0), (2, 4, 16, 16), jnp.float32)

    outputs = jax.jit(shell_forward)(params, image)
    outputs = jax.block_until_ready(outputs)

    # shape checks
    (pif_conf, pif_reg), (paf_conf, paf_reg), alignment = outputs
    assert pif_conf.shape == (2, 5, 16, 16)
    assert pif_reg.shape == (2, 5, 2, 16, 16)
    assert paf_conf.shape == (2, 3, 16, 16)
    assert paf_reg.shape == (2, 3, 2, 16, 16)
    assert alignment.shape == (2, 19, 16, 16)

    # numerical check against the unfused pure-JAX f32 reference
    # (tolerances sized for bf16 MXU inputs with f32 accumulation)
    ref = shell_forward_reference(params, image)
    flat_out = jax.tree_util.tree_leaves(outputs)
    flat_ref = jax.tree_util.tree_leaves(ref)
    for a, b in zip(flat_out, flat_ref):
        np.testing.assert_allclose(np.asarray(a, dtype=np.float32),
                                   np.asarray(b, dtype=np.float32),
                                   rtol=2e-2, atol=2e-2)

    print("KERNEL_OK")
</pallas_src>

<mosaic_0001>
module attributes {stable_mosaic.version = 11 : i64} {
  func.func @_shell_fused_kernel(%arg0: i32, %arg1: memref<256x36xbf16, #tpu.memory_space<vmem>>, %arg2: memref<36x32xbf16, #tpu.memory_space<vmem>>, %arg3: memref<1x32xf32, #tpu.memory_space<vmem>>, %arg4: memref<32x128xbf16, #tpu.memory_space<vmem>>, %arg5: memref<1x128xf32, #tpu.memory_space<vmem>>, %arg6: memref<256x128xbf16, #tpu.memory_space<vmem>>) attributes {dimension_semantics = [#tpu.dimension_semantics<parallel>], iteration_bounds = array<i64: 2>, scalar_prefetch = 0 : i64, scratch_operands = 0 : i64, tpu.core_type = #tpu.core_type<tc>, window_params = [{transform_indices = @transform_0, window_bounds = array<i64: 256, 36>}, {pipeline_mode = #tpu.pipeline_mode<synchronous>, transform_indices = @transform_1, window_bounds = array<i64: 36, 32>}, {pipeline_mode = #tpu.pipeline_mode<synchronous>, transform_indices = @transform_2, window_bounds = array<i64: 1, 32>}, {pipeline_mode = #tpu.pipeline_mode<synchronous>, transform_indices = @transform_3, window_bounds = array<i64: 32, 128>}, {pipeline_mode = #tpu.pipeline_mode<synchronous>, transform_indices = @transform_4, window_bounds = array<i64: 1, 128>}, {transform_indices = @transform_5, window_bounds = array<i64: 256, 128>}]} {
    %c0 = arith.constant 0 : index
    %c0_0 = arith.constant 0 : index
    %0 = vector.load %arg1[%c0, %c0_0] : memref<256x36xbf16, #tpu.memory_space<vmem>>, vector<256x36xbf16>
    %c0_1 = arith.constant 0 : index
    %c0_2 = arith.constant 0 : index
    %1 = vector.load %arg2[%c0_1, %c0_2] : memref<36x32xbf16, #tpu.memory_space<vmem>>, vector<36x32xbf16>
    %cst = arith.constant dense<0.000000e+00> : vector<256x32xf32>
    %2 = tpu.matmul %0, %1, %cst {dimension_numbers = #tpu.dot_dimension_numbers<[1], [0], [0], [1], [0, 0, 1, 1], [], []>} : vector<256x36xbf16>, vector<36x32xbf16>, vector<256x32xf32> -> vector<256x32xf32>
    %c0_3 = arith.constant 0 : index
    %c0_4 = arith.constant 0 : index
    %3 = vector.load %arg3[%c0_3, %c0_4] : memref<1x32xf32, #tpu.memory_space<vmem>>, vector<1x32xf32>
    %4 = vector.broadcast %3 : vector<1x32xf32> to vector<256x32xf32>
    %5 = arith.addf %2, %4 : vector<256x32xf32>
    %cst_5 = arith.constant 0.000000e+00 : f32
    %6 = vector.broadcast %cst_5 : f32 to vector<256x32xf32>
    %7 = arith.maximumf %5, %6 : vector<256x32xf32>
    %8 = arith.truncf %7 : vector<256x32xf32> to vector<256x32xbf16>
    %c0_6 = arith.constant 0 : index
    %c0_7 = arith.constant 0 : index
    %9 = vector.load %arg4[%c0_6, %c0_7] : memref<32x128xbf16, #tpu.memory_space<vmem>>, vector<32x128xbf16>
    %cst_8 = arith.constant dense<0.000000e+00> : vector<256x128xf32>
    %10 = tpu.matmul %8, %9, %cst_8 {dimension_numbers = #tpu.dot_dimension_numbers<[1], [0], [0], [1], [0, 0, 1, 1], [], []>} : vector<256x32xbf16>, vector<32x128xbf16>, vector<256x128xf32> -> vector<256x128xf32>
    %c0_9 = arith.constant 0 : index
    %c0_10 = arith.constant 0 : index
    %11 = vector.load %arg5[%c0_9, %c0_10] : memref<1x128xf32, #tpu.memory_space<vmem>>, vector<1x128xf32>
    %12 = vector.broadcast %11 : vector<1x128xf32> to vector<256x128xf32>
    %13 = arith.addf %10, %12 : vector<256x128xf32>
    %14 = arith.truncf %13 : vector<256x128xf32> to vector<256x128xbf16>
    %c0_11 = arith.constant 0 : index
    %c0_12 = arith.constant 0 : index
    %15 = vector.load %arg6[%c0_11, %c0_12] : memref<256x128xbf16, #tpu.memory_space<vmem>>, vector<256x128xbf16>
    tpu.vector_store %arg6[%c0_11, %c0_12], %14 {strides = array<i32>} : memref<256x128xbf16, #tpu.memory_space<vmem>>, vector<256x128xbf16>,
    return
  }
  func.func @transform_0(%arg0: i32) -> (i32, i32) {
    %c0_i32 = arith.constant 0 : i32
    %c0_i32_0 = arith.constant 0 : i32
    return %arg0, %c0_i32 : i32, i32
  }
  func.func @transform_1(%arg0: i32) -> (i32, i32) {
    %c0_i32 = arith.constant 0 : i32
    %c0_i32_0 = arith.constant 0 : i32
    %c0_i32_1 = arith.constant 0 : i32
    return %c0_i32, %c0_i32_0 : i32, i32
  }
  func.func @transform_2(%arg0: i32) -> (i32, i32) {
    %c0_i32 = arith.constant 0 : i32
    %c0_i32_0 = arith.constant 0 : i32
    %c0_i32_1 = arith.constant 0 : i32
    return %c0_i32, %c0_i32_0 : i32, i32
  }
  func.func @transform_3(%arg0: i32) -> (i32, i32) {
    %c0_i32 = arith.constant 0 : i32
    %c0_i32_0 = arith.constant 0 : i32
    %c0_i32_1 = arith.constant 0 : i32
    return %c0_i32, %c0_i32_0 : i32, i32
  }
  func.func @transform_4(%arg0: i32) -> (i32, i32) {
    %c0_i32 = arith.constant 0 : i32
    %c0_i32_0 = arith.constant 0 : i32
    %c0_i32_1 = arith.constant 0 : i32
    return %c0_i32, %c0_i32_0 : i32, i32
  }
  func.func @transform_5(%arg0: i32) -> (i32, i32) {
    %c0_i32 = arith.constant 0 : i32
    %c0_i32_0 = arith.constant 0 : i32
    return %arg0, %c0_i32 : i32, i32
  }
}

</mosaic_0001>

<llo_original>
// kernel: shell_forward.1
$region0: #{shell_forward.1}
  #allocation0 [shape = 'u32[]', space=smem, size = 0x4, offset = 0x4, fixed_abs, tag = 'smem constant byte address 0x4 - core index']
  #allocation1 [shape = 'u32[72,128]{1,0:T(1,128)}', space=vmem, size = 0x9000, scoped, tag = 'internal scratch']
  %s0 = inlined_call_operand.vmem [shape: bf16[512,36], index: 0, kind: input, shape index: {}]
  %s1 = inlined_call_operand.vmem [shape: bf16[36,32], index: 1, kind: input, shape index: {}]
  %s2 = inlined_call_operand.vmem [shape: f32[1,32], index: 2, kind: input, shape index: {}]
  %s3 = inlined_call_operand.vmem [shape: bf16[32,128], index: 3, kind: input, shape index: {}]
  %s4 = inlined_call_operand.vmem [shape: f32[1,128], index: 4, kind: input, shape index: {}]
  %s5 = inlined_call_operand.vmem [shape: bf16[512,128], index: 5, kind: output, shape index: {}]
  %s6 = sld [smem:[#allocation0]]
  $region53: #{shell_forward.1} parent=0
    _
  %s8 = ssub.s32 1, %s6
  %s9 = scalar_select 0, %s8, %s6
  loop: start=0, step=1, limit=4
  $region2: #{shell_forward.1} parent=0 // loop_pre_header
    _
  $region3: #{shell_forward.1} parent=0 // loop_header
    %s11 = sphi 0, %s15
    %p12 = scmp.ge.s32.totalorder %s11, 4
    %s21 = sphi 0, %s23
    %s24 = sphi 0, %s21
    %s25 = sphi 0, %s24
    %s41 = sphi 0, %s25
    %s45 = sphi 0, %s45
    %s47 = sphi 0, %s45
    %s48 = sphi 0, %s47
    %s62 = sphi 0, %s48
    %s66 = sphi 0, %s66
    %s68 = sphi 0, %s66
    %s69 = sphi 0, %s68
    %s83 = sphi 0, %s69
    %s87 = sphi 0, %s87
    %s89 = sphi 0, %s87
    %s90 = sphi 0, %s89
    %s104 = sphi 0, %s90
    %s108 = sphi 0, %s108
    %s110 = sphi 0, %s108
    %s111 = sphi 0, %s110
    %s125 = sphi 0, %s111
    %s131 = sphi 0, %s133
    %s134 = sphi 0, %s131
    %s135 = sphi 0, %s134
    %s151 = sphi 0, %s135
  $region4: #{shell_forward.1} parent=0 // loop_header_branch
    %14 = sbr.rel (%p12) target = $region8
  $region5: #{shell_forward.1} parent=0 // loop_body
    %s16 = ssub.s32 %s11, 1
    %s17 = ssub.s32 %s11, 2
    %s18 = sadd.s32 %s11, 1
    %s19 = ssub.s32 %s11, %s18
    %p20 = scmp.eq.s32.totalorder %s19, 0
    %s22 = sadd.s32 %s21, 1
    %s23 = scalar_select %p20, %s21, %s22
    %p26 = pneg %p20
    %p27 = scmp.eq.s32.totalorder %s11, 1
    %p28 = por %p26, %p27
    %p29 = scmp.ne.s32.totalorder %s21, %s24
    %p30 = scmp.eq.s32.totalorder %s11, 0
    %p31 = por %p29, %p30
    %p32 = scmp.ne.s32.totalorder %s21, %s24
    %p33 = scmp.eq.s32.totalorder %s16, 1
    %p34 = por %p32, %p33
    %p35 = scmp.ne.s32.totalorder %s24, %s25
    %p36 = scmp.eq.s32.totalorder %s16, 0
    %p37 = por %p35, %p36
    %p38 = scmp.ne.s32.totalorder %s24, %s25
    %p39 = scmp.eq.s32.totalorder %s17, 1
    %p40 = por %p38, %p39
    %p42 = scmp.ne.s32.totalorder %s25, %s41
    %p43 = scmp.eq.s32.totalorder %s17, 0
    %p44 = por %p42, %p43
    %s46 = sadd.s32 %s45, 1
    %p49 = scmp.eq.s32.totalorder %s11, 1
    %p50 = scmp.ne.s32.totalorder %s45, %s47
    %p51 = scmp.eq.s32.totalorder %s11, 0
    %p52 = por %p50, %p51
    %p53 = scmp.ne.s32.totalorder %s45, %s47
    %p54 = scmp.eq.s32.totalorder %s16, 1
    %p55 = por %p53, %p54
    %p56 = scmp.ne.s32.totalorder %s47, %s48
    %p57 = scmp.eq.s32.totalorder %s16, 0
    %p58 = por %p56, %p57
    %p59 = scmp.ne.s32.totalorder %s47, %s48
    %p60 = scmp.eq.s32.totalorder %s17, 1
    %p61 = por %p59, %p60
    %p63 = scmp.ne.s32.totalorder %s48, %s62
    %p64 = scmp.eq.s32.totalorder %s17, 0
    %p65 = por %p63, %p64
    %s67 = sadd.s32 %s66, 1
    %p70 = scmp.eq.s32.totalorder %s11, 1
    %p71 = scmp.ne.s32.totalorder %s66, %s68
    %p72 = scmp.eq.s32.totalorder %s11, 0
    %p73 = por %p71, %p72
    %p74 = scmp.ne.s32.totalorder %s66, %s68
    %p75 = scmp.eq.s32.totalorder %s16, 1
    %p76 = por %p74, %p75
    %p77 = scmp.ne.s32.totalorder %s68, %s69
    %p78 = scmp.eq.s32.totalorder %s16, 0
    %p79 = por %p77, %p78
    %p80 = scmp.ne.s32.totalorder %s68, %s69
    %p81 = scmp.eq.s32.totalorder %s17, 1
    %p82 = por %p80, %p81
    %p84 = scmp.ne.s32.totalorder %s69, %s83
    %p85 = scmp.eq.s32.totalorder %s17, 0
    %p86 = por %p84, %p85
    %s88 = sadd.s32 %s87, 1
    %p91 = scmp.eq.s32.totalorder %s11, 1
    %p92 = scmp.ne.s32.totalorder %s87, %s89
    %p93 = scmp.eq.s32.totalorder %s11, 0
    %p94 = por %p92, %p93
    %p95 = scmp.ne.s32.totalorder %s87, %s89
    %p96 = scmp.eq.s32.totalorder %s16, 1
    %p97 = por %p95, %p96
    %p98 = scmp.ne.s32.totalorder %s89, %s90
    %p99 = scmp.eq.s32.totalorder %s16, 0
    %p100 = por %p98, %p99
    %p101 = scmp.ne.s32.totalorder %s89, %s90
    %p102 = scmp.eq.s32.totalorder %s17, 1
    %p103 = por %p101, %p102
    %p105 = scmp.ne.s32.totalorder %s90, %s104
    %p106 = scmp.eq.s32.totalorder %s17, 0
    %p107 = por %p105, %p106
    %s109 = sadd.s32 %s108, 1
    %p112 = scmp.eq.s32.totalorder %s11, 1
    %p113 = scmp.ne.s32.totalorder %s108, %s110
    %p114 = scmp.eq.s32.totalorder %s11, 0
    %p115 = por %p113, %p114
    %p116 = scmp.ne.s32.totalorder %s108, %s110
    %p117 = scmp.eq.s32.totalorder %s16, 1
    %p118 = por %p116, %p117
    %p119 = scmp.ne.s32.totalorder %s110, %s111
    %p120 = scmp.eq.s32.totalorder %s16, 0
    %p121 = por %p119, %p120
    %p122 = scmp.ne.s32.totalorder %s110, %s111
    %p123 = scmp.eq.s32.totalorder %s17, 1
    %p124 = por %p122, %p123
    %p126 = scmp.ne.s32.totalorder %s111, %s125
    %p127 = scmp.eq.s32.totalorder %s17, 0
    %p128 = por %p126, %p127
    %s129 = ssub.s32 %s11, %s18
    %p130 = scmp.eq.s32.totalorder %s129, 0
    %s132 = sadd.s32 %s131, 1
    %s133 = scalar_select %p130, %s131, %s132
    %p136 = pneg %p130
    %p137 = scmp.eq.s32.totalorder %s11, 1
    %p138 = por %p136, %p137
    %p139 = scmp.ne.s32.totalorder %s131, %s134
    %p140 = scmp.eq.s32.totalorder %s11, 0
    %p141 = por %p139, %p140
    %p142 = scmp.ne.s32.totalorder %s131, %s134
    %p143 = scmp.eq.s32.totalorder %s16, 1
    %p144 = por %p142, %p143
    %p145 = scmp.ne.s32.totalorder %s134, %s135
    %p146 = scmp.eq.s32.totalorder %s16, 0
    %p147 = por %p145, %p146
    %p148 = scmp.ne.s32.totalorder %s134, %s135
    %p149 = scmp.eq.s32.totalorder %s17, 1
    %p150 = por %p148, %p149
    %p152 = scmp.ne.s32.totalorder %s135, %s151
    %p153 = scmp.eq.s32.totalorder %s17, 0
    %p154 = por %p152, %p153
    %p155 = scmp.le.s32.totalorder 1, %s11
    %p156 = scmp.lt.s32.totalorder %s11, 3
    %p157 = pnand %p155, %p156
    %p158 = pneg %p157
    // Predicated region
    $region9: #{shell_forward.1} parent=5 // pred_check
      _
    $region10: #{shell_forward.1} parent=5 // pred_check_branch
      %160 = sbr.rel (%p157) target = $region12
    $region11: #{shell_forward.1} parent=5 // pred_region
      %s161 = ssub.s32 %s11, 1
      // Predicated region
      $region13: #{shell_forward.1} parent=11 // pred_check
        %p162 = pneg %p58
      $region14: #{shell_forward.1} parent=11 // pred_check_branch
        %164 = sbr.rel (%p162) target = $region16
      $region15: #{shell_forward.1} parent=11 // pred_region
        _
      $region16: #{shell_forward.1} parent=11 // pred_fallthru
        _
      // Predicated region
      $region17: #{shell_forward.1} parent=11 // pred_check
        %p165 = pneg %p79
      $region18: #{shell_forward.1} parent=11 // pred_check_branch
        %167 = sbr.rel (%p165) target = $region20
      $region19: #{shell_forward.1} parent=11 // pred_region
        _
      $region20: #{shell_forward.1} parent=11 // pred_fallthru
        _
      // Predicated region
      $region21: #{shell_forward.1} parent=11 // pred_check
        %p168 = pneg %p100
      $region22: #{shell_forward.1} parent=11 // pred_check_branch
        %170 = sbr.rel (%p168) target = $region24
      $region23: #{shell_forward.1} parent=11 // pred_region
        _
      $region24: #{shell_forward.1} parent=11 // pred_fallthru
        _
      // Predicated region
      $region25: #{shell_forward.1} parent=11 // pred_check
        %p171 = pneg %p121
      $region26: #{shell_forward.1} parent=11 // pred_check_branch
        %173 = sbr.rel (%p171) target = $region28
      $region27: #{shell_forward.1} parent=11 // pred_region
        _
      $region28: #{shell_forward.1} parent=11 // pred_fallthru
        _
    $region12: #{shell_forward.1} parent=5 // pred_fallthru
      _
    %p174 = scmp.lt.s32.totalorder %s11, 2
    // Predicated region
    $region29: #{shell_forward.1} parent=5 // pred_check
      %p175 = pneg %p174
    $region30: #{shell_forward.1} parent=5 // pred_check_branch
      %177 = sbr.rel (%p175) target = $region32
    $region31: #{shell_forward.1} parent=5 // pred_region
      // Predicated region
      $region33: #{shell_forward.1} parent=31 // pred_check
        %p178 = pneg %p31
      $region34: #{shell_forward.1} parent=31 // pred_check_branch
        %180 = sbr.rel (%p178) target = $region36
      $region35: #{shell_forward.1} parent=31 // pred_region
        %s181 = smul.u32 32, %s11
        %p182 = scmp.lt.s32.totalorder %s181, 63
        %s183 = scalar_select %p182, %s181, 63
        %s184 = smul.addr %s183, 4
        %s185 = scalar_lea.vmem %s0, %s184
        %s186 = smul.u32 32, %s11
      $region36: #{shell_forward.1} parent=31 // pred_fallthru
        _
    $region32: #{shell_forward.1} parent=5 // pred_fallthru
      _
    %p187 = scmp.le.s32.totalorder 1, %s11
    %p188 = scmp.lt.s32.totalorder %s11, 3
    %p189 = pnand %p187, %p188
    %p190 = pneg %p189
    // Predicated region
    $region37: #{shell_forward.1} parent=5 // pred_check
      _
    $region38: #{shell_forward.1} parent=5 // pred_check_branch
      %192 = sbr.rel (%p189) target = $region40
    $region39: #{shell_forward.1} parent=5 // pred_region
      %s193 = ssub.s32 %s11, 1
      %s194 = smul.u32 32, %s16
      %p195 = scmp.lt.s32.totalorder %s194, 63
      %s196 = scalar_select %p195, %s194, 63
      %s197 = smul.addr %s196, 4
      %s198 = scalar_lea.vmem %s0, %s197
      %p199 = pneg %p37
      %p200 = pneg %p34
      %p201 = pneg %p58
      %p202 = pneg %p55
      %p203 = pneg %p79
      %p204 = pneg %p76
      %p205 = pneg %p100
      %p206 = pneg %p97
      %p207 = pneg %p121
      %p208 = pneg %p118
      %p209 = pneg %p147
      %p210 = pneg %p144
      %s211 = smul.u32 32, %s16
      %p212 = scmp.lt.s32.totalorder %s211, 63
      %s213 = scalar_select %p212, %s211, 63
      %s214 = smul.addr %s213, 4
      %s215 = scalar_lea.vmem %s5, %s214
      %s216 = smul.u32 32, %s16
      %p217 = scmp.lt.s32.totalorder %s216, 63
      %s218 = scalar_select %p217, %s216, 63
      %s219 = smul.addr %s218, 4
      %s220 = scalar_lea.vmem %s0, %s219
      %s221 = smul.u32 32, %s16
      %s222 = smul.u32 32, %s16
      %p223 = scmp.lt.s32.totalorder %s222, 63
      %s224 = scalar_select %p223, %s222, 63
      %s225 = smul.addr %s224, 4
      %s226 = scalar_lea.vmem %s5, %s225
      %s227 = smul.u32 32, %s16
      %v229 = vld [vmem:[%s220] sm:$0xf]
      %v230 = vld [vmem:[%s220 + $0x4] sm:$0xf]
      %v231 = vld [vmem:[%s220 + $0x8] sm:$0xf]
      %v232 = vld [vmem:[%s220 + $0xc] sm:$0xf]
      %v233 = vld [vmem:[%s220 + $0x10] sm:$0xf]
      %v234 = vld [vmem:[%s220 + $0x14] sm:$0xf]
      %v235 = vld [vmem:[%s220 + $0x18] sm:$0xf]
      %v236 = vld [vmem:[%s220 + $0x1c] sm:$0xf]
      %v237 = vld [vmem:[%s220 + $0x20] sm:$0xf]
      %v238 = vld [vmem:[%s220 + $0x24] sm:$0xf]
      %v239 = vld [vmem:[%s220 + $0x28] sm:$0xf]
      %v240 = vld [vmem:[%s220 + $0x2c] sm:$0xf]
      %v241 = vld [vmem:[%s220 + $0x30] sm:$0xf]
      %v242 = vld [vmem:[%s220 + $0x34] sm:$0xf]
      %v243 = vld [vmem:[%s220 + $0x38] sm:$0xf]
      %v244 = vld [vmem:[%s220 + $0x3c] sm:$0xf]
      %v245 = vld [vmem:[%s220 + $0x40] sm:$0xf]
      %v246 = vld [vmem:[%s220 + $0x44] sm:$0xf]
      %v247 = vld [vmem:[%s220 + $0x48] sm:$0xf]
      %v248 = vld [vmem:[%s220 + $0x4c] sm:$0xf]
      %v249 = vld [vmem:[%s220 + $0x50] sm:$0xf]
      %v250 = vld [vmem:[%s220 + $0x54] sm:$0xf]
      %v251 = vld [vmem:[%s220 + $0x58] sm:$0xf]
      %v252 = vld [vmem:[%s220 + $0x5c] sm:$0xf]
      %v253 = vld [vmem:[%s220 + $0x60] sm:$0xf]
      %v254 = vld [vmem:[%s220 + $0x64] sm:$0xf]
      %v255 = vld [vmem:[%s220 + $0x68] sm:$0xf]
      %v256 = vld [vmem:[%s220 + $0x6c] sm:$0xf]
      %v257 = vld [vmem:[%s220 + $0x70] sm:$0xf]
      %v258 = vld [vmem:[%s220 + $0x74] sm:$0xf]
      %v259 = vld [vmem:[%s220 + $0x78] sm:$0xf]
      %v260 = vld [vmem:[%s220 + $0x7c] sm:$0xf]
      %v261 = vld [vmem:[%s1] sm:$0xf]
      %v262 = vld [vmem:[%s1 + $0x4] sm:$0xf]
      %v263 = vld [vmem:[%s1 + $0x8] sm:$0xf]
      %v264 = vld [vmem:[%s1 + $0xc] sm:$0xf]
      %v265 = vld [vmem:[%s1 + $0x10] sm:$0x3]
      %v266 = vld [vmem:[%s2] sm:$0x1]
      %v268 = vperm.slane %v266, 0
      %v302 = vunpack.c.l.b16 %v229
      %v303 = vunpack.c.l.b16 %v230
      %v304 = vunpack.c.l.b16 %v231
      %v305 = vunpack.c.l.b16 %v232
      %v306 = vunpack.c.l.b16 %v233
      %v307 = vunpack.c.l.b16 %v234
      %v308 = vunpack.c.l.b16 %v235
      %v309 = vunpack.c.l.b16 %v236
      %v310 = vunpack.c.l.b16 %v237
      %v311 = vunpack.c.l.b16 %v238
      %v312 = vunpack.c.l.b16 %v239
      %v313 = vunpack.c.l.b16 %v240
      %v314 = vunpack.c.l.b16 %v241
      %v315 = vunpack.c.l.b16 %v242
      %v316 = vunpack.c.l.b16 %v243
      %v317 = vunpack.c.l.b16 %v244
      %v318 = vunpack.c.l.b16 %v245
      %v319 = vunpack.c.l.b16 %v246
      %v320 = vunpack.c.l.b16 %v247
      %v321 = vunpack.c.l.b16 %v248
      %v322 = vunpack.c.l.b16 %v249
      %v323 = vunpack.c.l.b16 %v250
      %v324 = vunpack.c.l.b16 %v251
      %v325 = vunpack.c.l.b16 %v252
      %v326 = vunpack.c.l.b16 %v253
      %v327 = vunpack.c.l.b16 %v254
      %v328 = vunpack.c.l.b16 %v255
      %v329 = vunpack.c.l.b16 %v256
      %v330 = vunpack.c.l.b16 %v257
      %v331 = vunpack.c.l.b16 %v258
      %v332 = vunpack.c.l.b16 %v259
      %v333 = vunpack.c.l.b16 %v260
      %v334 = vpack.c.b16 %v303, %v302
      %v335 = vpack.c.b16 %v305, %v304
      %v336 = vpack.c.b16 %v307, %v306
      %v337 = vpack.c.b16 %v309, %v308
      %v338 = vpack.c.b16 %v311, %v310
      %v339 = vpack.c.b16 %v313, %v312
      %v340 = vpack.c.b16 %v315, %v314
      %v341 = vpack.c.b16 %v317, %v316
      %v342 = vpack.c.b16 %v319, %v318
      %v343 = vpack.c.b16 %v321, %v320
      %v344 = vpack.c.b16 %v323, %v322
      %v345 = vpack.c.b16 %v325, %v324
      %v346 = vpack.c.b16 %v327, %v326
      %v347 = vpack.c.b16 %v329, %v328
      %v348 = vpack.c.b16 %v331, %v330
      %v349 = vpack.c.b16 %v333, %v332
      %v355 = vunpack.c.l.b16 %v261
      %v356 = vunpack.c.l.b16 %v262
      %v357 = vunpack.c.l.b16 %v263
      %v358 = vunpack.c.l.b16 %v264
      %v359 = vunpack.c.l.b16 %v265
      %v360 = vpack.c.b16 %v356, %v355
      %v361 = vpack.c.b16 %v358, %v357
      %v362 = vpack.c.b16 %v359, %v359
      %vm365 = vcmask 293888
      %v367 = vsel %vm365, %v334, 0
      %v370 = vsel %vm365, %v335, 0
      %v373 = vsel %vm365, %v336, 0
      %v376 = vsel %vm365, %v337, 0
      %v379 = vsel %vm365, %v338, 0
      %v382 = vsel %vm365, %v339, 0
      %v385 = vsel %vm365, %v340, 0
      %v388 = vsel %vm365, %v341, 0
      %v391 = vsel %vm365, %v342, 0
      %v394 = vsel %vm365, %v343, 0
      %v397 = vsel %vm365, %v344, 0
      %v400 = vsel %vm365, %v345, 0
      %v403 = vsel %vm365, %v346, 0
      %v406 = vsel %vm365, %v347, 0
      %v409 = vsel %vm365, %v348, 0
      %v412 = vsel %vm365, %v349, 0
      %vm414 = vcmask 1041408
      %v416 = vsel %vm414, %v362, 0
      %418 = vmatpush.bf16.msra.mxu0 0
      %419 = vmatpush.bf16.msra.mxu0 0
      %420 = vmatpush.bf16.msra.mxu0 0
      %421 = vmatpush.bf16.msra.mxu0 0
      %422 = vmatpush.bf16.msra.mxu0 0
      %423 = vmatpush.bf16.msra.mxu0 %v416
      %424 = vmatpush.bf16.msra.mxu0 %v361
      %425 = vmatpush.bf16.msra.mxu0 %v360
      %426 = vmatmul.bf16.gmra.mxu0 %v367
      %v427 = vpop.f32.mrf.mxu0
      %v428 = vadd.f32 %v268, %v427
      %v429 = vpop.f32.mrf.mxu0
      %v430 = vadd.f32 %v268, %v429
      %431 = vmatmul.bf16.gmra.mxu0 %v370
      %v432 = vpop.f32.mrf.mxu0
      %v433 = vadd.f32 %v268, %v432
      %v434 = vpop.f32.mrf.mxu0
      %v435 = vadd.f32 %v268, %v434
      %436 = vmatmul.bf16.gmra.mxu0 %v373
      %v437 = vpop.f32.mrf.mxu0
      %v438 = vadd.f32 %v268, %v437
      %v439 = vpop.f32.mrf.mxu0
      %v440 = vadd.f32 %v268, %v439
      %441 = vmatmul.bf16.gmra.mxu0 %v376
      %v442 = vpop.f32.mrf.mxu0
      %v443 = vadd.f32 %v268, %v442
      %v444 = vpop.f32.mrf.mxu0
      %v445 = vadd.f32 %v268, %v444
      %446 = vmatmul.bf16.gmra.mxu0 %v379
      %v447 = vpop.f32.mrf.mxu0
      %v448 = vadd.f32 %v268, %v447
      %v449 = vpop.f32.mrf.mxu0
      %v450 = vadd.f32 %v268, %v449
      %451 = vmatmul.bf16.gmra.mxu0 %v382
      %v452 = vpop.f32.mrf.mxu0
      %v453 = vadd.f32 %v268, %v452
      %v454 = vpop.f32.mrf.mxu0
      %v455 = vadd.f32 %v268, %v454
      %456 = vmatmul.bf16.gmra.mxu0 %v385
      %v457 = vpop.f32.mrf.mxu0
      %v458 = vadd.f32 %v268, %v457
      %v459 = vpop.f32.mrf.mxu0
      %v460 = vadd.f32 %v268, %v459
      %461 = vmatmul.bf16.gmra.mxu0 %v388
      %v462 = vpop.f32.mrf.mxu0
      %v463 = vadd.f32 %v268, %v462
      %v464 = vpop.f32.mrf.mxu0
      %v465 = vadd.f32 %v268, %v464
      %466 = vmatmul.bf16.gmra.mxu0 %v391
      %v467 = vpop.f32.mrf.mxu0
      %v468 = vadd.f32 %v268, %v467
      %v469 = vpop.f32.mrf.mxu0
      %v470 = vadd.f32 %v268, %v469
      %471 = vmatmul.bf16.gmra.mxu0 %v394
      %v472 = vpop.f32.mrf.mxu0
      %v473 = vadd.f32 %v268, %v472
      %v474 = vpop.f32.mrf.mxu0
      %v475 = vadd.f32 %v268, %v474
      %476 = vmatmul.bf16.gmra.mxu0 %v397
      %v477 = vpop.f32.mrf.mxu0
      %v478 = vadd.f32 %v268, %v477
      %v479 = vpop.f32.mrf.mxu0
      %v480 = vadd.f32 %v268, %v479
      %481 = vmatmul.bf16.gmra.mxu0 %v400
      %v482 = vpop.f32.mrf.mxu0
      %v483 = vadd.f32 %v268, %v482
      %v484 = vpop.f32.mrf.mxu0
      %v485 = vadd.f32 %v268, %v484
      %486 = vmatmul.bf16.gmra.mxu0 %v403
      %v487 = vpop.f32.mrf.mxu0
      %v488 = vadd.f32 %v268, %v487
      %v489 = vpop.f32.mrf.mxu0
      %v490 = vadd.f32 %v268, %v489
      %491 = vmatmul.bf16.gmra.mxu0 %v406
      %v492 = vpop.f32.mrf.mxu0
      %v493 = vadd.f32 %v268, %v492
      %v494 = vpop.f32.mrf.mxu0
      %v495 = vadd.f32 %v268, %v494
      %496 = vmatmul.bf16.gmra.mxu0 %v409
      %v497 = vpop.f32.mrf.mxu0
      %v498 = vadd.f32 %v268, %v497
      %v499 = vpop.f32.mrf.mxu0
      %v500 = vadd.f32 %v268, %v499
      %501 = vmatmul.bf16.gmra.mxu0 %v412
      %v502 = vpop.f32.mrf.mxu0
      %v503 = vadd.f32 %v268, %v502
      %v504 = vpop.f32.mrf.mxu0
      %v505 = vadd.f32 %v268, %v504
      %506 = vdwg.mxu0
      %v507 = vmax.f32 %v428, 0.0
      %v508 = vmax.f32 %v430, 0.0
      %v509 = vmax.f32 %v433, 0.0
      %v510 = vmax.f32 %v435, 0.0
      %v511 = vmax.f32 %v438, 0.0
      %v512 = vmax.f32 %v440, 0.0
      %v513 = vmax.f32 %v443, 0.0
      %v514 = vmax.f32 %v445, 0.0
      %v515 = vmax.f32 %v448, 0.0
      %v516 = vmax.f32 %v450, 0.0
      %v517 = vmax.f32 %v453, 0.0
      %v518 = vmax.f32 %v455, 0.0
      %v519 = vmax.f32 %v458, 0.0
      %v520 = vmax.f32 %v460, 0.0
      %v521 = vmax.f32 %v463, 0.0
      %v522 = vmax.f32 %v465, 0.0
      %v523 = vmax.f32 %v468, 0.0
      %v524 = vmax.f32 %v470, 0.0
      %v525 = vmax.f32 %v473, 0.0
      %v526 = vmax.f32 %v475, 0.0
      %v527 = vmax.f32 %v478, 0.0
      %v528 = vmax.f32 %v480, 0.0
      %v529 = vmax.f32 %v483, 0.0
      %v530 = vmax.f32 %v485, 0.0
      %v531 = vmax.f32 %v488, 0.0
      %v532 = vmax.f32 %v490, 0.0
      %v533 = vmax.f32 %v493, 0.0
      %v534 = vmax.f32 %v495, 0.0
      %v535 = vmax.f32 %v498, 0.0
      %v536 = vmax.f32 %v500, 0.0
      %v537 = vmax.f32 %v503, 0.0
      %v538 = vmax.f32 %v505, 0.0
      %v539 = vpack.c.bf16 %v508, %v507
      %v540 = vpack.c.bf16 %v510, %v509
      %v541 = vpack.c.bf16 %v512, %v511
      %v542 = vpack.c.bf16 %v514, %v513
      %v543 = vpack.c.bf16 %v516, %v515
      %v544 = vpack.c.bf16 %v518, %v517
      %v545 = vpack.c.bf16 %v520, %v519
      %v546 = vpack.c.bf16 %v522, %v521
      %v547 = vpack.c.bf16 %v524, %v523
      %v548 = vpack.c.bf16 %v526, %v525
      %v549 = vpack.c.bf16 %v528, %v527
      %v550 = vpack.c.bf16 %v530, %v529
      %v551 = vpack.c.bf16 %v532, %v531
      %v552 = vpack.c.bf16 %v534, %v533
      %v553 = vpack.c.bf16 %v536, %v535
      %v554 = vpack.c.bf16 %v538, %v537
      %v555 = vld [vmem:[%s3] sm:$0xf]
      %v556 = vld [vmem:[%s3 + $0x4] sm:$0xf]
      %v557 = vld [vmem:[%s3 + $0x8] sm:$0xf]
      %v558 = vld [vmem:[%s3 + $0xc] sm:$0xf]
      %v559 = vld [vmem:[%s4] sm:$0x1]
      %v561 = vperm.slane %v559, 0
      %v567 = vunpack.c.l.b16 %v555
      %v568 = vunpack.c.l.b16 %v556
      %v569 = vunpack.c.l.b16 %v557
      %v570 = vunpack.c.l.b16 %v558
      %v571 = vpack.c.b16 %v568, %v567
      %v572 = vpack.c.b16 %v570, %v569
      %vm575 = vcmask 261120
      %v577 = vsel %vm575, %v539, 0
      %v580 = vsel %vm575, %v540, 0
      %v583 = vsel %vm575, %v541, 0
      %v586 = vsel %vm575, %v542, 0
      %v589 = vsel %vm575, %v543, 0
      %v592 = vsel %vm575, %v544, 0
      %v595 = vsel %vm575, %v545, 0
      %v598 = vsel %vm575, %v546, 0
      %v601 = vsel %vm575, %v547, 0
      %v604 = vsel %vm575, %v548, 0
      %v607 = vsel %vm575, %v549, 0
      %v610 = vsel %vm575, %v550, 0
      %v613 = vsel %vm575, %v551, 0
      %v616 = vsel %vm575, %v552, 0
      %v619 = vsel %vm575, %v553, 0
      %v622 = vsel %vm575, %v554, 0
      %624 = vmatpush.bf16.msra.mxu0 0
      %625 = vmatpush.bf16.msra.mxu0 0
      %626 = vmatpush.bf16.msra.mxu0 0
      %627 = vmatpush.bf16.msra.mxu0 0
      %628 = vmatpush.bf16.msra.mxu0 0
      %629 = vmatpush.bf16.msra.mxu0 0
      %630 = vmatpush.bf16.msra.mxu0 %v572
      %631 = vmatpush.bf16.msra.mxu0 %v571
      %632 = vmatmul.bf16.gmra.mxu0 %v577
      %v633 = vpop.f32.mrf.mxu0
      %v634 = vadd.f32 %v561, %v633
      %v635 = vpop.f32.mrf.mxu0
      %v636 = vadd.f32 %v561, %v635
      %637 = vmatmul.bf16.gmra.mxu0 %v580
      %v638 = vpop.f32.mrf.mxu0
      %v639 = vadd.f32 %v561, %v638
      %v640 = vpop.f32.mrf.mxu0
      %v641 = vadd.f32 %v561, %v640
      %642 = vmatmul.bf16.gmra.mxu0 %v583
      %v643 = vpop.f32.mrf.mxu0
      %v644 = vadd.f32 %v561, %v643
      %v645 = vpop.f32.mrf.mxu0
      %v646 = vadd.f32 %v561, %v645
      %647 = vmatmul.bf16.gmra.mxu0 %v586
      %v648 = vpop.f32.mrf.mxu0
      %v649 = vadd.f32 %v561, %v648
      %v650 = vpop.f32.mrf.mxu0
      %v651 = vadd.f32 %v561, %v650
      %652 = vmatmul.bf16.gmra.mxu0 %v589
      %v653 = vpop.f32.mrf.mxu0
      %v654 = vadd.f32 %v561, %v653
      %v655 = vpop.f32.mrf.mxu0
      %v656 = vadd.f32 %v561, %v655
      %657 = vmatmul.bf16.gmra.mxu0 %v592
      %v658 = vpop.f32.mrf.mxu0
      %v659 = vadd.f32 %v561, %v658
      %v660 = vpop.f32.mrf.mxu0
      %v661 = vadd.f32 %v561, %v660
      %662 = vmatmul.bf16.gmra.mxu0 %v595
      %v663 = vpop.f32.mrf.mxu0
      %v664 = vadd.f32 %v561, %v663
      %v665 = vpop.f32.mrf.mxu0
      %v666 = vadd.f32 %v561, %v665
      %667 = vmatmul.bf16.gmra.mxu0 %v598
      %v668 = vpop.f32.mrf.mxu0
      %v669 = vadd.f32 %v561, %v668
      %v670 = vpop.f32.mrf.mxu0
      %v671 = vadd.f32 %v561, %v670
      %672 = vmatmul.bf16.gmra.mxu0 %v601
      %v673 = vpop.f32.mrf.mxu0
      %v674 = vadd.f32 %v561, %v673
      %v675 = vpop.f32.mrf.mxu0
      %v676 = vadd.f32 %v561, %v675
      %677 = vmatmul.bf16.gmra.mxu0 %v604
      %v678 = vpop.f32.mrf.mxu0
      %v679 = vadd.f32 %v561, %v678
      %v680 = vpop.f32.mrf.mxu0
      %v681 = vadd.f32 %v561, %v680
      %682 = vmatmul.bf16.gmra.mxu0 %v607
      %v683 = vpop.f32.mrf.mxu0
      %v684 = vadd.f32 %v561, %v683
      %v685 = vpop.f32.mrf.mxu0
      %v686 = vadd.f32 %v561, %v685
      %687 = vmatmul.bf16.gmra.mxu0 %v610
      %v688 = vpop.f32.mrf.mxu0
      %v689 = vadd.f32 %v561, %v688
      %v690 = vpop.f32.mrf.mxu0
      %v691 = vadd.f32 %v561, %v690
      %692 = vmatmul.bf16.gmra.mxu0 %v613
      %v693 = vpop.f32.mrf.mxu0
      %v694 = vadd.f32 %v561, %v693
      %v695 = vpop.f32.mrf.mxu0
      %v696 = vadd.f32 %v561, %v695
      %697 = vmatmul.bf16.gmra.mxu0 %v616
      %v698 = vpop.f32.mrf.mxu0
      %v699 = vadd.f32 %v561, %v698
      %v700 = vpop.f32.mrf.mxu0
      %v701 = vadd.f32 %v561, %v700
      %702 = vmatmul.bf16.gmra.mxu0 %v619
      %v703 = vpop.f32.mrf.mxu0
      %v704 = vadd.f32 %v561, %v703
      %v705 = vpop.f32.mrf.mxu0
      %v706 = vadd.f32 %v561, %v705
      %707 = vmatmul.bf16.gmra.mxu0 %v622
      %v708 = vpop.f32.mrf.mxu0
      %v709 = vadd.f32 %v561, %v708
      %v710 = vpop.f32.mrf.mxu0
      %v711 = vadd.f32 %v561, %v710
      %712 = vdwg.mxu0
      %v713 = vpack.c.bf16 %v634, %v634
      %v714 = vpack.c.bf16 %v636, %v636
      %v715 = vpack.c.bf16 %v639, %v639
      %v716 = vpack.c.bf16 %v641, %v641
      %v717 = vpack.c.bf16 %v644, %v644
      %v718 = vpack.c.bf16 %v646, %v646
      %v719 = vpack.c.bf16 %v649, %v649
      %v720 = vpack.c.bf16 %v651, %v651
      %v721 = vpack.c.bf16 %v654, %v654
      %v722 = vpack.c.bf16 %v656, %v656
      %v723 = vpack.c.bf16 %v659, %v659
      %v724 = vpack.c.bf16 %v661, %v661
      %v725 = vpack.c.bf16 %v664, %v664
      %v726 = vpack.c.bf16 %v666, %v666
      %v727 = vpack.c.bf16 %v669, %v669
      %v728 = vpack.c.bf16 %v671, %v671
      %v729 = vpack.c.bf16 %v674, %v674
      %v730 = vpack.c.bf16 %v676, %v676
      %v731 = vpack.c.bf16 %v679, %v679
      %v732 = vpack.c.bf16 %v681, %v681
      %v733 = vpack.c.bf16 %v684, %v684
      %v734 = vpack.c.bf16 %v686, %v686
      %v735 = vpack.c.bf16 %v689, %v689
      %v736 = vpack.c.bf16 %v691, %v691
      %v737 = vpack.c.bf16 %v694, %v694
      %v738 = vpack.c.bf16 %v696, %v696
      %v739 = vpack.c.bf16 %v699, %v699
      %v740 = vpack.c.bf16 %v701, %v701
      %v741 = vpack.c.bf16 %v704, %v704
      %v742 = vpack.c.bf16 %v706, %v706
      %v743 = vpack.c.bf16 %v709, %v709
      %v744 = vpack.c.bf16 %v711, %v711
      %745 = vst [vmem:[%s226] sm:$0xf] %v713
      %746 = vst [vmem:[%s226 + $0x4] sm:$0xf] %v714
      %747 = vst [vmem:[%s226 + $0x8] sm:$0xf] %v715
      %748 = vst [vmem:[%s226 + $0xc] sm:$0xf] %v716
      %749 = vst [vmem:[%s226 + $0x10] sm:$0xf] %v717
      %750 = vst [vmem:[%s226 + $0x14] sm:$0xf] %v718
      %751 = vst [vmem:[%s226 + $0x18] sm:$0xf] %v719
      %752 = vst [vmem:[%s226 + $0x1c] sm:$0xf] %v720
      %753 = vst [vmem:[%s226 + $0x20] sm:$0xf] %v721
      %754 = vst [vmem:[%s226 + $0x24] sm:$0xf] %v722
      %755 = vst [vmem:[%s226 + $0x28] sm:$0xf] %v723
      %756 = vst [vmem:[%s226 + $0x2c] sm:$0xf] %v724
      %757 = vst [vmem:[%s226 + $0x30] sm:$0xf] %v725
      %758 = vst [vmem:[%s226 + $0x34] sm:$0xf] %v726
      %759 = vst [vmem:[%s226 + $0x38] sm:$0xf] %v727
      %760 = vst [vmem:[%s226 + $0x3c] sm:$0xf] %v728
      %761 = vst [vmem:[%s226 + $0x40] sm:$0xf] %v729
      %762 = vst [vmem:[%s226 + $0x44] sm:$0xf] %v730
      %763 = vst [vmem:[%s226 + $0x48] sm:$0xf] %v731
      %764 = vst [vmem:[%s226 + $0x4c] sm:$0xf] %v732
      %765 = vst [vmem:[%s226 + $0x50] sm:$0xf] %v733
      %766 = vst [vmem:[%s226 + $0x54] sm:$0xf] %v734
      %767 = vst [vmem:[%s226 + $0x58] sm:$0xf] %v735
      %768 = vst [vmem:[%s226 + $0x5c] sm:$0xf] %v736
      %769 = vst [vmem:[%s226 + $0x60] sm:$0xf] %v737
      %770 = vst [vmem:[%s226 + $0x64] sm:$0xf] %v738
      %771 = vst [vmem:[%s226 + $0x68] sm:$0xf] %v739
      %772 = vst [vmem:[%s226 + $0x6c] sm:$0xf] %v740
      %773 = vst [vmem:[%s226 + $0x70] sm:$0xf] %v741
      %774 = vst [vmem:[%s226 + $0x74] sm:$0xf] %v742
      %775 = vst [vmem:[%s226 + $0x78] sm:$0xf] %v743
      %776 = vst [vmem:[%s226 + $0x7c] sm:$0xf] %v744
      %s777 = smul.u32 32, %s16
      %p778 = scmp.lt.s32.totalorder %s777, 63
      %s779 = scalar_select %p778, %s777, 63
      %s780 = smul.addr %s779, 4
      %s781 = scalar_lea.vmem %s5, %s780
      // Predicated region
      $region41: #{shell_forward.1} parent=39 // pred_check
        %p782 = pneg %p144
      $region42: #{shell_forward.1} parent=39 // pred_check_branch
        %784 = sbr.rel (%p782) target = $region44
      $region43: #{shell_forward.1} parent=39 // pred_region
        %s785 = smul.u32 32, %s16
      $region44: #{shell_forward.1} parent=39 // pred_fallthru
        _
    $region40: #{shell_forward.1} parent=5 // pred_fallthru
      _
    %p786 = scmp.le.s32.totalorder 2, %s11
    // Predicated region
    $region45: #{shell_forward.1} parent=5 // pred_check
      %p787 = pneg %p786
    $region46: #{shell_forward.1} parent=5 // pred_check_branch
      %789 = sbr.rel (%p787) target = $region48
    $region47: #{shell_forward.1} parent=5 // pred_region
      %s790 = ssub.s32 %s11, 2
      // Predicated region
      $region49: #{shell_forward.1} parent=47 // pred_check
        %p791 = pneg %p150
      $region50: #{shell_forward.1} parent=47 // pred_check_branch
        %793 = sbr.rel (%p791) target = $region52
      $region51: #{shell_forward.1} parent=47 // pred_region
        %s794 = smul.u32 32, %s17
        %p795 = scmp.lt.s32.totalorder %s794, 63
        %s796 = scalar_select %p795, %s794, 63
        %s797 = smul.addr %s796, 4
        %s798 = scalar_lea.vmem %s5, %s797
      $region52: #{shell_forward.1} parent=47 // pred_fallthru
        _
    $region48: #{shell_forward.1} parent=5 // pred_fallthru
      _
  $region6: #{shell_forward.1} parent=0 // loop_footer
    %s15 = sadd.s32 1, %s11
  $region7: #{shell_forward.1} parent=0 // loop_footer_branch
    %10 = sbr.rel target = $region3
  $region8: #{shell_forward.1} parent=0 // loop_exit
    _

</llo_original>
